<compile_context>
chip_gen: v7x
topology: tpu7x:2x2x1
jax: 0.10.0
libtpu: 0.0.40
codegen_flags: <defaults>
</compile_context>

<pallas_src>
import functools
import math

import jax
import jax.numpy as jnp
from jax.experimental import pallas as pl
from jax.experimental.pallas import tpu as pltpu


def _round_up(n, m):
    return ((n + m - 1) // m) * m


def _mlp_kernel(xt_ref, w1_ref, b1_ref, w2_ref, b2_ref, out_ref):
    # xt_ref : [D_in, TB]  bf16   (streamed tile, batch on lanes)
    # w1_ref : [H, D_in]   bf16   (resident; native PyTorch layout)
    # b1_ref : [H, 1]      f32    (resident)
    # w2_ref : [1, H]      bf16   (resident; native PyTorch layout)
    # b2_ref : [1, 1]      f32    (resident)
    # out_ref: [1, TB]     f32    (lane-dense output tile)

    # Layer 1: Linear + ReLU  (MXU bf16 matmul, f32 accumulate)
    h1 = jnp.dot(w1_ref[...], xt_ref[...],
                 preferred_element_type=jnp.float32)          # [H, TB] f32
    h1 = jnp.maximum(h1 + b1_ref[...], 0.0)                   # f32 VPU ops

    # Layer 2: Linear -> single output row (batch stays on lanes)
    pred = jnp.dot(w2_ref[...], h1.astype(jnp.bfloat16),
                   preferred_element_type=jnp.float32)        # [1, TB] f32
    out_ref[...] = (pred + b2_ref[...]).astype(out_ref.dtype)


@functools.partial(jax.jit, static_argnames=())
def mlp_regression_forward(x, w1, b1, w2, b2):
    """x: [B, D_in] ; w1: [H, D_in] ; b1: [H] ; w2: [1, H] ; b2: [1] -> [B]."""
    B, D_in = x.shape
    H = w1.shape[0]

    # Batch tile: multiple of 128 lanes, capped at 512 (reviewer's sweet spot
    # given the tiny feature dims); pad B up to a multiple of TB.
    TB = min(512, _round_up(max(B, 1), 128))
    B_pad = _round_up(B, TB)
    grid = (B_pad // TB,)

    # Lane-dense transposed layout: batch on the lane (last) axis.
    # Under jit the cast + transpose + pad fuse into a single layout pass.
    xt = jnp.transpose(x).astype(jnp.bfloat16)                # [D_in, B]
    if B_pad != B:
        xt = jnp.pad(xt, ((0, 0), (0, B_pad - B)))            # [D_in, B_pad]

    w1b = w1.astype(jnp.bfloat16)                             # [H, D_in]
    w2b = w2.astype(jnp.bfloat16)                             # [1, H]
    b1c = b1.astype(jnp.float32).reshape(H, 1)                # [H, 1]
    b2c = b2.astype(jnp.float32).reshape(1, 1)                # [1, 1]

    out = pl.pallas_call(
        _mlp_kernel,
        out_shape=jax.ShapeDtypeStruct((1, B_pad), jnp.float32),
        grid_spec=pltpu.PrefetchScalarGridSpec(
            num_scalar_prefetch=0,
            grid=grid,
            in_specs=[
                pl.BlockSpec((D_in, TB), lambda i: (0, i)),   # x^T : streamed
                pl.BlockSpec((H, D_in), lambda i: (0, 0)),    # W1  : resident
                pl.BlockSpec((H, 1), lambda i: (0, 0)),       # b1  : resident
                pl.BlockSpec((1, H), lambda i: (0, 0)),       # w2  : resident
                pl.BlockSpec((1, 1), lambda i: (0, 0)),       # b2  : resident
            ],
            out_specs=pl.BlockSpec((1, TB), lambda i: (0, i)),
        ),
        compiler_params=pltpu.CompilerParams(
            dimension_semantics=("parallel",),                # megacore on v7x
        ),
    )(xt, w1b, b1c, w2b, b2c)

    return out[0, :B]                                         # [B]


def _reference(x, w1, b1, w2, b2):
    """Pure-JAX reference matching the kernel's bf16-input / f32-accum path."""
    xb = x.astype(jnp.bfloat16).astype(jnp.float32)
    w1b = w1.astype(jnp.bfloat16).astype(jnp.float32)
    w2b = w2.astype(jnp.bfloat16).astype(jnp.float32)
    h1 = jnp.maximum(xb @ w1b.T + b1.astype(jnp.float32), 0.0)
    h1b = h1.astype(jnp.bfloat16).astype(jnp.float32)
    pred = h1b @ w2b.T + b2.astype(jnp.float32)
    return pred[:, 0]


if __name__ == "__main__":
    # Small shapes consistent with the module: MLPRegression(input_size=32,
    # hidden_size=32) applied to a batch of 8 feature vectors.
    B, D_in, H = 8, 32, 32

    key = jax.random.PRNGKey(0)
    kx, kw1, kb1, kw2, kb2 = jax.random.split(key, 5)

    x = jax.random.normal(kx, (B, D_in), jnp.float32)

    # Parameters kept in native PyTorch nn.Linear layout ([out, in] weights).
    limit1 = math.sqrt(6.0 / (H + D_in))
    w1 = jax.random.uniform(kw1, (H, D_in), jnp.float32, -limit1, limit1)
    b1 = 0.1 * jax.random.normal(kb1, (H,), jnp.float32)
    limit2 = math.sqrt(6.0 / (1 + H))
    w2 = jax.random.uniform(kw2, (1, H), jnp.float32, -limit2, limit2)
    b2 = 0.1 * jax.random.normal(kb2, (1,), jnp.float32)

    pred = mlp_regression_forward(x, w1, b1, w2, b2)
    jax.block_until_ready(pred)
    assert pred.shape == (B,)
    assert jnp.allclose(pred, _reference(x, w1, b1, w2, b2), atol=2e-3, rtol=2e-3)

    # Second check: larger batch exercising the multi-tile grid + padding path.
    B2 = 1300
    x2 = jax.random.normal(jax.random.PRNGKey(1), (B2, D_in), jnp.float32)
    pred2 = mlp_regression_forward(x2, w1, b1, w2, b2)
    jax.block_until_ready(pred2)
    assert pred2.shape == (B2,)
    assert jnp.allclose(pred2, _reference(x2, w1, b1, w2, b2), atol=2e-3, rtol=2e-3)

    print("KERNEL_OK")
</pallas_src>

<mosaic_0001>
module attributes {stable_mosaic.version = 11 : i64} {
  func.func @_mlp_kernel(%arg0: i32, %arg1: memref<32x128xbf16, #tpu.memory_space<vmem>>, %arg2: memref<32x32xbf16, #tpu.memory_space<vmem>>, %arg3: memref<32x1xf32, #tpu.memory_space<vmem>>, %arg4: memref<1x32xbf16, #tpu.memory_space<vmem>>, %arg5: memref<1x1xf32, #tpu.memory_space<vmem>>, %arg6: memref<1x128xf32, #tpu.memory_space<vmem>>) attributes {dimension_semantics = [#tpu.dimension_semantics<parallel>], iteration_bounds = array<i64: 1>, scalar_prefetch = 0 : i64, scratch_operands = 0 : i64, tpu.core_type = #tpu.core_type<tc>, window_params = [{transform_indices = @transform_0, window_bounds = array<i64: 32, 128>}, {pipeline_mode = #tpu.pipeline_mode<synchronous>, transform_indices = @transform_1, window_bounds = array<i64: 32, 32>}, {pipeline_mode = #tpu.pipeline_mode<synchronous>, transform_indices = @transform_2, window_bounds = array<i64: 32, 1>}, {pipeline_mode = #tpu.pipeline_mode<synchronous>, transform_indices = @transform_3, window_bounds = array<i64: 1, 32>}, {pipeline_mode = #tpu.pipeline_mode<synchronous>, transform_indices = @transform_4, window_bounds = array<i64: 1, 1>}, {transform_indices = @transform_5, window_bounds = array<i64: 1, 128>}]} {
    %c0 = arith.constant 0 : index
    %c0_0 = arith.constant 0 : index
    %0 = vector.load %arg2[%c0, %c0_0] : memref<32x32xbf16, #tpu.memory_space<vmem>>, vector<32x32xbf16>
    %c0_1 = arith.constant 0 : index
    %c0_2 = arith.constant 0 : index
    %1 = vector.load %arg1[%c0_1, %c0_2] : memref<32x128xbf16, #tpu.memory_space<vmem>>, vector<32x128xbf16>
    %cst = arith.constant dense<0.000000e+00> : vector<32x128xf32>
    %2 = tpu.matmul %0, %1, %cst {dimension_numbers = #tpu.dot_dimension_numbers<[1], [0], [0], [1], [0, 0, 1, 1], [], []>} : vector<32x32xbf16>, vector<32x128xbf16>, vector<32x128xf32> -> vector<32x128xf32>
    %c0_3 = arith.constant 0 : index
    %c0_4 = arith.constant 0 : index
    %3 = vector.load %arg3[%c0_3, %c0_4] : memref<32x1xf32, #tpu.memory_space<vmem>>, vector<32x1xf32>
    %4 = vector.broadcast %3 : vector<32x1xf32> to vector<32x128xf32>
    %5 = arith.addf %2, %4 : vector<32x128xf32>
    %cst_5 = arith.constant 0.000000e+00 : f32
    %6 = vector.broadcast %cst_5 : f32 to vector<32x128xf32>
    %7 = arith.maximumf %5, %6 : vector<32x128xf32>
    %c0_6 = arith.constant 0 : index
    %c0_7 = arith.constant 0 : index
    %8 = vector.load %arg4[%c0_6, %c0_7] : memref<1x32xbf16, #tpu.memory_space<vmem>>, vector<1x32xbf16>
    %9 = arith.truncf %7 : vector<32x128xf32> to vector<32x128xbf16>
    %cst_8 = arith.constant dense<0.000000e+00> : vector<1x128xf32>
    %10 = tpu.matmul %8, %9, %cst_8 {dimension_numbers = #tpu.dot_dimension_numbers<[1], [0], [0], [1], [0, 0, 1, 1], [], []>} : vector<1x32xbf16>, vector<32x128xbf16>, vector<1x128xf32> -> vector<1x128xf32>
    %c0_9 = arith.constant 0 : index
    %c0_10 = arith.constant 0 : index
    %11 = vector.load %arg5[%c0_9, %c0_10] : memref<1x1xf32, #tpu.memory_space<vmem>>, vector<1x1xf32>
    %12 = vector.broadcast %11 : vector<1x1xf32> to vector<1x128xf32>
    %13 = arith.addf %10, %12 : vector<1x128xf32>
    %c0_11 = arith.constant 0 : index
    %c0_12 = arith.constant 0 : index
    %14 = vector.load %arg6[%c0_11, %c0_12] : memref<1x128xf32, #tpu.memory_space<vmem>>, vector<1x128xf32>
    tpu.vector_store %arg6[%c0_11, %c0_12], %13 {strides = array<i32>} : memref<1x128xf32, #tpu.memory_space<vmem>>, vector<1x128xf32>,
    return
  }
  func.func @transform_0(%arg0: i32) -> (i32, i32) {
    %c0_i32 = arith.constant 0 : i32
    %c0_i32_0 = arith.constant 0 : i32
    return %c0_i32, %arg0 : i32, i32
  }
  func.func @transform_1(%arg0: i32) -> (i32, i32) {
    %c0_i32 = arith.constant 0 : i32
    %c0_i32_0 = arith.constant 0 : i32
    %c0_i32_1 = arith.constant 0 : i32
    return %c0_i32, %c0_i32_0 : i32, i32
  }
  func.func @transform_2(%arg0: i32) -> (i32, i32) {
    %c0_i32 = arith.constant 0 : i32
    %c0_i32_0 = arith.constant 0 : i32
    %c0_i32_1 = arith.constant 0 : i32
    return %c0_i32, %c0_i32_0 : i32, i32
  }
  func.func @transform_3(%arg0: i32) -> (i32, i32) {
    %c0_i32 = arith.constant 0 : i32
    %c0_i32_0 = arith.constant 0 : i32
    %c0_i32_1 = arith.constant 0 : i32
    return %c0_i32, %c0_i32_0 : i32, i32
  }
  func.func @transform_4(%arg0: i32) -> (i32, i32) {
    %c0_i32 = arith.constant 0 : i32
    %c0_i32_0 = arith.constant 0 : i32
    %c0_i32_1 = arith.constant 0 : i32
    return %c0_i32, %c0_i32_0 : i32, i32
  }
  func.func @transform_5(%arg0: i32) -> (i32, i32) {
    %c0_i32 = arith.constant 0 : i32
    %c0_i32_0 = arith.constant 0 : i32
    return %c0_i32, %arg0 : i32, i32
  }
}

</mosaic_0001>

<llo_original>
// kernel: mlp_regression_forward.1
$region0: #{mlp_regression_forward.1}
  #allocation0 [shape = 'u32[]', space=smem, size = 0x4, offset = 0x4, fixed_abs, tag = 'smem constant byte address 0x4 - core index']
  #allocation1 [shape = 'u32[144,128]{1,0:T(1,128)}', space=vmem, size = 0x12000, scoped, tag = 'internal scratch']
  #allocation2 [shape = 'f32[1,1]{1,0:T(1,128)S(1)}', space=vmem, size = 0x200, scoped, tag = 'scoped memory for mlp_regression_forward.1']
  %s0 = inlined_call_operand.vmem [shape: bf16[32,128], index: 0, kind: input, shape index: {}]
  %s1 = inlined_call_operand.vmem [shape: bf16[32,32], index: 1, kind: input, shape index: {}]
  %s2 = inlined_call_operand.vmem [shape: f32[32,1], index: 2, kind: input, shape index: {}]
  %s3 = inlined_call_operand.vmem [shape: bf16[1,32], index: 3, kind: input, shape index: {}]
  %s4 = inlined_call_operand.<no memory space> [shape: f32[1,1], index: 4, kind: input, shape index: {}]
  %s5 = inlined_call_operand.vmem [shape: f32[1,128], index: 5, kind: output, shape index: {}]
  %s6 = sld [smem:[#allocation0]]
  $region30: #{mlp_regression_forward.1} parent=0
    _
  %s8 = ssub.s32 1, %s6
  %s9 = scalar_select 0, %s8, %s6
  %v10 = vstv %s4
  %11 = vst [vmem:[#allocation2] sm:$0x1] %v10
  // Predicated region
  $region2: #{mlp_regression_forward.1} parent=0 // pred_check
    _
  $region3: #{mlp_regression_forward.1} parent=0 // pred_check_branch
    %13 = sbr.rel (0) target = $region5
  $region4: #{mlp_regression_forward.1} parent=0 // pred_region
    _
  $region5: #{mlp_regression_forward.1} parent=0 // pred_fallthru
    _
  // Predicated region
  $region6: #{mlp_regression_forward.1} parent=0 // pred_check
    _
  $region7: #{mlp_regression_forward.1} parent=0 // pred_check_branch
    %15 = sbr.rel (0) target = $region9
  $region8: #{mlp_regression_forward.1} parent=0 // pred_region
    _
  $region9: #{mlp_regression_forward.1} parent=0 // pred_fallthru
    _
  // Predicated region
  $region10: #{mlp_regression_forward.1} parent=0 // pred_check
    _
  $region11: #{mlp_regression_forward.1} parent=0 // pred_check_branch
    %17 = sbr.rel (0) target = $region13
  $region12: #{mlp_regression_forward.1} parent=0 // pred_region
    _
  $region13: #{mlp_regression_forward.1} parent=0 // pred_fallthru
    _
  // Predicated region
  $region14: #{mlp_regression_forward.1} parent=0 // pred_check
    _
  $region15: #{mlp_regression_forward.1} parent=0 // pred_check_branch
    %19 = sbr.rel (0) target = $region17
  $region16: #{mlp_regression_forward.1} parent=0 // pred_region
    _
  $region17: #{mlp_regression_forward.1} parent=0 // pred_fallthru
    _
  // Predicated region
  $region18: #{mlp_regression_forward.1} parent=0 // pred_check
    _
  $region19: #{mlp_regression_forward.1} parent=0 // pred_check_branch
    %21 = sbr.rel (0) target = $region21
  $region20: #{mlp_regression_forward.1} parent=0 // pred_region
    _
  $region21: #{mlp_regression_forward.1} parent=0 // pred_fallthru
    _
  %v23 = vld [vmem:[%s1] sm:$0xf]
  %v24 = vld [vmem:[%s1 + $0x4] sm:$0xf]
  %v25 = vld [vmem:[%s1 + $0x8] sm:$0xf]
  %v26 = vld [vmem:[%s1 + $0xc] sm:$0xf]
  %v27 = vld [vmem:[%s0] sm:$0xf]
  %v28 = vld [vmem:[%s0 + $0x4] sm:$0xf]
  %v29 = vld [vmem:[%s0 + $0x8] sm:$0xf]
  %v30 = vld [vmem:[%s0 + $0xc] sm:$0xf]
  %v31 = vld [vmem:[%s2] sm:$0xff]
  %v32 = vld [vmem:[%s2 + $0x8] sm:$0xff]
  %v33 = vld [vmem:[%s2 + $0x10] sm:$0xff]
  %v34 = vld [vmem:[%s2 + $0x18] sm:$0xff]
  %36 = vset.pattern.permute.xlu0 0
  %37 = vperm.xlu0 %36, %v31
  %v38 = vpop.permute.xlu0 %37
  %41 = vset.pattern.permute.xlu0 0
  %42 = vperm.xlu0 %41, %v32
  %v43 = vpop.permute.xlu0 %42
  %46 = vset.pattern.permute.xlu0 0
  %47 = vperm.xlu0 %46, %v33
  %v48 = vpop.permute.xlu0 %47
  %51 = vset.pattern.permute.xlu0 0
  %52 = vperm.xlu0 %51, %v34
  %v53 = vpop.permute.xlu0 %52
  %v59 = vunpack.c.l.b16 %v23
  %v60 = vunpack.c.l.b16 %v24
  %v61 = vunpack.c.l.b16 %v25
  %v62 = vunpack.c.l.b16 %v26
  %v63 = vpack.c.b16 %v60, %v59
  %v64 = vpack.c.b16 %v62, %v61
  %v69 = vunpack.c.l.b16 %v27
  %v70 = vunpack.c.l.b16 %v28
  %v71 = vunpack.c.l.b16 %v29
  %v72 = vunpack.c.l.b16 %v30
  %v73 = vpack.c.b16 %v70, %v69
  %v74 = vpack.c.b16 %v72, %v71
  %vm77 = vcmask 261120
  %v79 = vsel %vm77, %v63, 0
  %v82 = vsel %vm77, %v64, 0
  %84 = vmatprep.subr.bf16.mxu0 0
  %85 = vmatpush1.bf16.msra.mxu0 %v73
  %86 = vmatprep.subr.bf16.mxu0 0
  %87 = vmatpush1.bf16.msra.mxu0 %v74
  %88 = vmatprep.subr.bf16.mxu0 0
  %89 = vmatpush1.bf16.msra.mxu0 0
  %90 = vmatprep.subr.bf16.mxu0 0
  %91 = vmatpush1.bf16.msra.mxu0 0
  %92 = vmatprep.subr.bf16.mxu0 0
  %93 = vmatpush1.bf16.msra.mxu0 0
  %94 = vmatprep.subr.bf16.mxu0 0
  %95 = vmatpush1.bf16.msra.mxu0 0
  %96 = vmatprep.subr.bf16.mxu0 0
  %97 = vmatpush1.bf16.msra.mxu0 0
  %98 = vmatprep.subr.bf16.mxu0 0
  %99 = vmatpush1.bf16.msra.mxu0 0
  %100 = vmatprep.subr.bf16.mxu0 0
  %101 = vmatpush1.bf16.msra.mxu0 0
  %102 = vmatprep.subr.bf16.mxu0 0
  %103 = vmatpush1.bf16.msra.mxu0 0
  %104 = vmatprep.subr.bf16.mxu0 0
  %105 = vmatpush1.bf16.msra.mxu0 0
  %106 = vmatprep.subr.bf16.mxu0 0
  %107 = vmatpush1.bf16.msra.mxu0 0
  %108 = vmatprep.subr.bf16.mxu0 0
  %109 = vmatpush1.bf16.msra.mxu0 0
  %110 = vmatprep.subr.bf16.mxu0 0
  %111 = vmatpush1.bf16.msra.mxu0 0
  %112 = vmatprep.subr.bf16.mxu0 0
  %113 = vmatpush1.bf16.msra.mxu0 0
  %114 = vmatprep.subr.bf16.mxu0 0
  %115 = vmatpush1.bf16.msra.mxu0 0
  %116 = vmatprep.mubr.bf16.mxu0 0
  %117 = vmatmul.mubr.bf16.gmra.mrb[0].mxu0 %v79
  %v118 = vpop.f32.mrb[0].mxu0
  %v119 = vadd.f32 %v38, %v118
  %v120 = vpop.f32.mrb[0].mxu0
  %v121 = vpop.f32.mrb[0].mxu0
  %v122 = vadd.f32 %v43, %v121
  %v123 = vpop.f32.mrb[0].mxu0
  %124 = vmatprep.mubr.bf16.mxu0 0
  %125 = vmatmul.mubr.bf16.gmra.mrb[0].mxu0 %v82
  %v126 = vpop.f32.mrb[0].mxu0
  %v127 = vadd.f32 %v48, %v126
  %v128 = vpop.f32.mrb[0].mxu0
  %v129 = vpop.f32.mrb[0].mxu0
  %v130 = vadd.f32 %v53, %v129
  %v131 = vpop.f32.mrb[0].mxu0
  %132 = vdwg.mxu0
  %v133 = vmax.f32 %v119, 0.0
  %v134 = vmax.f32 %v122, 0.0
  %v135 = vmax.f32 %v127, 0.0
  %v136 = vmax.f32 %v130, 0.0
  %v137 = vld [vmem:[%s3] sm:$0x1]
  %v138 = vpack.c.bf16 %v134, %v133
  %v139 = vpack.c.bf16 %v136, %v135
  %v140 = vld [vmem:[#allocation2] sm:$0x1]
  %142 = vset.pattern.permute.xlu0 0
  %143 = vperm.xlu0 %142, %v140
  %v144 = vpop.permute.xlu0 %143
  %v146 = vlaneseq
  %v147 = vshrl.u32 %v146, 7
  %v148 = vsub.s32 0, %v147
  %v149 = vrot.slane %v144, %v148
  %v151 = vsel %vm77, %v137, 0
  %153 = vmatprep.subr.bf16.mxu0 0
  %154 = vmatpush1.bf16.msra.mxu0 %v138
  %155 = vmatprep.subr.bf16.mxu0 0
  %156 = vmatpush1.bf16.msra.mxu0 %v139
  %157 = vmatprep.subr.bf16.mxu0 0
  %158 = vmatpush1.bf16.msra.mxu0 0
  %159 = vmatprep.subr.bf16.mxu0 0
  %160 = vmatpush1.bf16.msra.mxu0 0
  %161 = vmatprep.subr.bf16.mxu0 0
  %162 = vmatpush1.bf16.msra.mxu0 0
  %163 = vmatprep.subr.bf16.mxu0 0
  %164 = vmatpush1.bf16.msra.mxu0 0
  %165 = vmatprep.subr.bf16.mxu0 0
  %166 = vmatpush1.bf16.msra.mxu0 0
  %167 = vmatprep.subr.bf16.mxu0 0
  %168 = vmatpush1.bf16.msra.mxu0 0
  %169 = vmatprep.subr.bf16.mxu0 0
  %170 = vmatpush1.bf16.msra.mxu0 0
  %171 = vmatprep.subr.bf16.mxu0 0
  %172 = vmatpush1.bf16.msra.mxu0 0
  %173 = vmatprep.subr.bf16.mxu0 0
  %174 = vmatpush1.bf16.msra.mxu0 0
  %175 = vmatprep.subr.bf16.mxu0 0
  %176 = vmatpush1.bf16.msra.mxu0 0
  %177 = vmatprep.subr.bf16.mxu0 0
  %178 = vmatpush1.bf16.msra.mxu0 0
  %179 = vmatprep.subr.bf16.mxu0 0
  %180 = vmatpush1.bf16.msra.mxu0 0
  %181 = vmatprep.subr.bf16.mxu0 0
  %182 = vmatpush1.bf16.msra.mxu0 0
  %183 = vmatprep.subr.bf16.mxu0 0
  %184 = vmatpush1.bf16.msra.mxu0 0
  %185 = vmatprep.mubr.bf16.mxu0 0
  %186 = vmatmul.mubr.bf16.gmra.mrb[0].mxu0 %v151
  %v187 = vpop.f32.mrb[0].mxu0
  %v188 = vadd.f32 %v149, %v187
  %v189 = vpop.f32.mrb[0].mxu0
  %v190 = vpop.f32.mrb[0].mxu0
  %v191 = vpop.f32.mrb[0].mxu0
  %192 = vdwg.mxu0
  %193 = vst [vmem:[%s5] sm:$0x1] %v188
  // Predicated region
  $region22: #{mlp_regression_forward.1} parent=0 // pred_check
    _
  $region23: #{mlp_regression_forward.1} parent=0 // pred_check_branch
    %195 = sbr.rel (0) target = $region25
  $region24: #{mlp_regression_forward.1} parent=0 // pred_region
    _
  $region25: #{mlp_regression_forward.1} parent=0 // pred_fallthru
    _
  // Predicated region
  $region26: #{mlp_regression_forward.1} parent=0 // pred_check
    _
  $region27: #{mlp_regression_forward.1} parent=0 // pred_check_branch
    %197 = sbr.rel (0) target = $region29
  $region28: #{mlp_regression_forward.1} parent=0 // pred_region
    _
  $region29: #{mlp_regression_forward.1} parent=0 // pred_fallthru
    _

</llo_original>
